<compile_context>
chip_gen: v6e
topology: v6e:2x2x1
jax: 0.10.0
libtpu: 0.0.40
codegen_flags: <defaults>
</compile_context>

<pallas_src>
import functools

import jax
import jax.numpy as jnp
from jax import lax
from jax.experimental import pallas as pl
from jax.experimental.pallas import tpu as pltpu

BN_EPS = 1e-5
LANE = 128


# ---------------------------------------------------------------------------
# shared helpers
# ---------------------------------------------------------------------------

def _mm(a, b):
    """bf16 MXU matmul with f32 accumulation (same cast points as the reference)."""
    return jnp.dot(a.astype(jnp.bfloat16), b.astype(jnp.bfloat16),
                   preferred_element_type=jnp.float32)


def _round_up(v, m):
    return -(-v // m) * m


def _pad_to(a, shape):
    pads = [(0, s - d) for d, s in zip(a.shape, shape)]
    if any(p[1] for p in pads):
        a = jnp.pad(a, pads)
    return a


def _largest_tile(n, pref, step=LANE):
    """Largest multiple of `step` <= pref that divides n (n is a multiple of `step`)."""
    t = min(pref, n)
    t -= t % step
    while t > step and n % t:
        t -= step
    return max(t, step)


def _vmem_limit(nbytes):
    """Right-size the scoped-VMEM limit from the estimated buffer footprint.

    2x headroom + 4 MiB slack, floored at 16 MiB (cheap everywhere) and capped at
    64 MiB so the request is valid on every generation (v7x physical VMEM = 64 MiB).
    """
    # TODO(synk): for extreme N the resident-T assumption (and this cap) would need a
    # k-tiled T as well; out of scope for the sizes exercised here.
    return int(min(max(2 * nbytes + (4 << 20), 16 << 20), 64 << 20))


# ---------------------------------------------------------------------------
# small-problem path: everything fused in one ungridded pallas_call
# ---------------------------------------------------------------------------

def _gnn_fused_kernel(x_ref, a_ref, pool_ref, we_ref, wg_ref, gamma_ref, beta_ref,
                      fcw_ref, fcb_ref, out_ref, *, num_layers):
    h = _mm(x_ref[...], we_ref[...])                      # (N, Dp) node embedding
    a_hat = a_ref[...]                                    # bf16 (N, N)
    for l in range(num_layers):
        t = _mm(a_hat, _mm(h, wg_ref[l]))                 # GCNConv (bias cancelled by BN)
        mean = jnp.mean(t, axis=0, keepdims=True)
        cen = t - mean
        var = jnp.mean(cen * cen, axis=0, keepdims=True)  # two-pass: no E[x^2]-E[x]^2 cancel
        h = cen * (gamma_ref[l] * lax.rsqrt(var + BN_EPS)) + beta_ref[l]
        if l < num_layers - 1:
            h = jnp.maximum(h, 0.0)                       # ReLU between layers only
    hp = _mm(pool_ref[...], h)                            # global_add_pool
    out_ref[...] = _mm(hp, fcw_ref[...]) + fcb_ref[...]   # final fc (lane-dense slab)


def _gnn_forward_fused(x, a_bf, p_bf, we, wg, ga, be, fw, fb, num_layers):
    num_graphs = p_bf.shape[0]
    c_pad = fw.shape[1]
    d_pad = wg.shape[1]
    kernel = functools.partial(_gnn_fused_kernel, num_layers=num_layers)
    vmem = pl.BlockSpec(memory_space=pltpu.MemorySpace.VMEM)
    nbytes = sum(int(a.size) * a.dtype.itemsize
                 for a in (x, a_bf, p_bf, we, wg, ga, be, fw, fb))
    nbytes += 3 * x.shape[0] * d_pad * 4                  # rough h/t intermediate budget
    return pl.pallas_call(
        kernel,
        out_shape=jax.ShapeDtypeStruct((num_graphs, c_pad), jnp.float32),
        in_specs=[vmem] * 9,
        out_specs=vmem,
        compiler_params=pltpu.CompilerParams(vmem_limit_bytes=_vmem_limit(nbytes)),
    )(x, a_bf, p_bf, we, wg, ga, be, fw, fb)


# ---------------------------------------------------------------------------
# large-problem path: gridded kernels
# ---------------------------------------------------------------------------

def _agg_stats_kernel(a_ref, t_ref, o_ref, sum_ref, ssq_ref, *, tile_k):
    """agg[rows] = A_hat[rows, :] @ T, with BN column sum / sum-of-squares in the finalize."""
    k = pl.program_id(1)

    @pl.when(k == 0)
    def _():
        o_ref[...] = jnp.zeros_like(o_ref)

    # T is resident in VMEM (full-extent, constant-index block): slice the k-tile in-kernel.
    koff = pl.multiple_of(k * tile_k, tile_k)
    o_ref[...] += jnp.dot(a_ref[...], t_ref[pl.ds(koff, tile_k), :],
                          preferred_element_type=jnp.float32)

    @pl.when(k == pl.num_programs(1) - 1)
    def _():
        acc = o_ref[...]
        sum_ref[...] = jnp.sum(acc, axis=0, keepdims=True)[None]
        ssq_ref[...] = jnp.sum(acc * acc, axis=0, keepdims=True)[None]


def _aggregate_tiled(a_bf, t_bf, tile_m, tile_k):
    n_pad = a_bf.shape[0]
    d = t_bf.shape[1]
    n_tiles_m = n_pad // tile_m
    kernel = functools.partial(_agg_stats_kernel, tile_k=tile_k)
    nbytes = (2 * tile_m * tile_k * 2        # A blocks (bf16, double-buffered)
              + 2 * n_pad * d * 2            # resident T (bf16)
              + 2 * tile_m * d * 4           # f32 output accumulator blocks
              + 4 * n_tiles_m * d * 4)       # stats blocks
    return pl.pallas_call(
        kernel,
        out_shape=(jax.ShapeDtypeStruct((n_pad, d), jnp.float32),
                   jax.ShapeDtypeStruct((n_tiles_m, 1, d), jnp.float32),
                   jax.ShapeDtypeStruct((n_tiles_m, 1, d), jnp.float32)),
        grid_spec=pltpu.PrefetchScalarGridSpec(
            num_scalar_prefetch=0,
            grid=(n_tiles_m, n_pad // tile_k),
            in_specs=[
                pl.BlockSpec((tile_m, tile_k), lambda i, k: (i, k)),
                # Full-extent, constant-index: fetched once, never re-streamed from HBM.
                # TODO(synk): pipeline_mode=pl.Buffered(1) would drop its second VMEM buffer.
                pl.BlockSpec((n_pad, d), lambda i, k: (0, 0)),
            ],
            out_specs=[
                pl.BlockSpec((tile_m, d), lambda i, k: (i, 0)),
                pl.BlockSpec((1, 1, d), lambda i, k: (i, 0, 0)),
                pl.BlockSpec((1, 1, d), lambda i, k: (i, 0, 0)),
            ]),
        compiler_params=pltpu.CompilerParams(
            # TODO(synk): on v7x (2 TensorCores) the row axis could use pltpu.CORE_PARALLEL
            # to split the O(N^2) stream across both cores; kept portable here.
            dimension_semantics=("parallel", "arbitrary"),
            vmem_limit_bytes=_vmem_limit(nbytes)),
    )(a_bf, t_bf)


def _embed_lin_kernel(x_ref, we_ref, wg0_ref, t_ref):
    t_ref[...] = _mm(_mm(x_ref[...], we_ref[...]), wg0_ref[...]).astype(t_ref.dtype)


def _embed_lin(x, we, wg0, tile_r):
    n_pad, in_dim = x.shape
    d = wg0.shape[1]
    nbytes = 2 * (tile_r * in_dim * 4 + tile_r * d * 2 + in_dim * d * 4 + d * d * 4)
    return pl.pallas_call(
        _embed_lin_kernel,
        out_shape=jax.ShapeDtypeStruct((n_pad, d), jnp.bfloat16),
        grid_spec=pltpu.PrefetchScalarGridSpec(
            num_scalar_prefetch=0,
            grid=(n_pad // tile_r,),
            in_specs=[pl.BlockSpec((tile_r, in_dim), lambda i: (i, 0)),
                      pl.BlockSpec(we.shape, lambda i: (0, 0)),
                      pl.BlockSpec(wg0.shape, lambda i: (0, 0))],
            out_specs=pl.BlockSpec((tile_r, d), lambda i: (i, 0))),
        compiler_params=pltpu.CompilerParams(
            dimension_semantics=("parallel",),
            vmem_limit_bytes=_vmem_limit(nbytes)),
    )(x, we, wg0)


def _bn_relu_lin_kernel(agg_ref, scale_ref, shift_ref, wg_ref, t_ref):
    h = jnp.maximum(agg_ref[...] * scale_ref[...] + shift_ref[...], 0.0)
    t_ref[...] = _mm(h, wg_ref[...]).astype(t_ref.dtype)


def _bn_relu_lin(agg, scale, shift, wg_next, tile_r):
    n_pad, d = agg.shape
    nbytes = 2 * (tile_r * d * 4 + tile_r * d * 2 + 2 * d * 4 + d * d * 4)
    return pl.pallas_call(
        _bn_relu_lin_kernel,
        out_shape=jax.ShapeDtypeStruct((n_pad, d), jnp.bfloat16),
        grid_spec=pltpu.PrefetchScalarGridSpec(
            num_scalar_prefetch=0,
            grid=(n_pad // tile_r,),
            in_specs=[pl.BlockSpec((tile_r, d), lambda i: (i, 0)),
                      pl.BlockSpec((1, d), lambda i: (0, 0)),
                      pl.BlockSpec((1, d), lambda i: (0, 0)),
                      pl.BlockSpec((d, d), lambda i: (0, 0))],
            out_specs=pl.BlockSpec((tile_r, d), lambda i: (i, 0))),
        compiler_params=pltpu.CompilerParams(
            dimension_semantics=("parallel",),
            vmem_limit_bytes=_vmem_limit(nbytes)),
    )(agg, scale, shift, wg_next)


def _bn_pool_fc_kernel(agg_ref, scale_ref, shift_ref, p_ref, fcw_ref, fcb_ref,
                       out_ref, pooled_ref):
    i = pl.program_id(0)

    @pl.when(i == 0)
    def _():
        pooled_ref[...] = jnp.zeros_like(pooled_ref)

    h = agg_ref[...] * scale_ref[...] + shift_ref[...]
    pooled_ref[...] += _mm(p_ref[...], h)                 # partial global_add_pool

    @pl.when(i == pl.num_programs(0) - 1)
    def _():
        out_ref[...] = _mm(pooled_ref[...], fcw_ref[...]) + fcb_ref[...]


def _bn_pool_fc(agg, scale, shift, p_bf, fw, fb, tile_r):
    n_pad, d = agg.shape
    num_graphs = p_bf.shape[0]
    c_pad = fw.shape[1]
    nbytes = (2 * tile_r * d * 4 + 2 * num_graphs * tile_r * 2
              + 2 * d * c_pad * 4 + num_graphs * d * 4
              + 2 * num_graphs * c_pad * 4 + 4 * d * 4)
    return pl.pallas_call(
        _bn_pool_fc_kernel,
        out_shape=jax.ShapeDtypeStruct((num_graphs, c_pad), jnp.float32),
        grid_spec=pltpu.PrefetchScalarGridSpec(
            num_scalar_prefetch=0,
            grid=(n_pad // tile_r,),
            in_specs=[pl.BlockSpec((tile_r, d), lambda i: (i, 0)),
                      pl.BlockSpec((1, d), lambda i: (0, 0)),
                      pl.BlockSpec((1, d), lambda i: (0, 0)),
                      pl.BlockSpec((num_graphs, tile_r), lambda i: (0, i)),
                      pl.BlockSpec((d, c_pad), lambda i: (0, 0)),
                      pl.BlockSpec((1, c_pad), lambda i: (0, 0))],
            out_specs=pl.BlockSpec((num_graphs, c_pad), lambda i: (0, 0)),
            scratch_shapes=[pltpu.VMEM((num_graphs, d), jnp.float32)]),
        compiler_params=pltpu.CompilerParams(
            dimension_semantics=("arbitrary",),     # output accumulates across row tiles
            vmem_limit_bytes=_vmem_limit(nbytes)),
    )(agg, scale, shift, p_bf, fw, fb)


def _gnn_forward_tiled(x, a_bf, p_bf, we, wg, ga, be, fw, fb, n_real):
    num_layers, d, _ = wg.shape
    n_pad = a_bf.shape[0]

    tile_m = _largest_tile(n_pad, 1024)     # aggregation output-row tile (big on all gens)
    tile_k = _largest_tile(n_pad, 512)      # aggregation reduction tile (A_hat k stream)
    tile_r = _largest_tile(n_pad, 1024)     # row tile for node-wise stages

    t = _embed_lin(x, we, wg[0], tile_r)    # (n_pad, d) bf16
    inv_n = 1.0 / float(n_real)

    out = None
    for l in range(num_layers):
        agg, col_sum, col_ssq = _aggregate_tiled(a_bf, t, tile_m, tile_k)
        # Tiny O(d) statistics combine (parameter-scale glue; padded rows are exact zeros
        # so they contribute nothing, and we divide by the real node count).
        mean = col_sum[:, 0, :].sum(axis=0, keepdims=True) * inv_n
        var = jnp.maximum(col_ssq[:, 0, :].sum(axis=0, keepdims=True) * inv_n - mean * mean, 0.0)
        scale = ga[l] * lax.rsqrt(var + BN_EPS)
        shift = be[l] - mean * scale
        if l < num_layers - 1:
            t = _bn_relu_lin(agg, scale, shift, wg[l + 1], tile_r)
        else:
            out = _bn_pool_fc(agg, scale, shift, p_bf, fw, fb, tile_r)
    return out


# ---------------------------------------------------------------------------
# public wrapper
# ---------------------------------------------------------------------------

def gnn_forward(x, a_hat, pool, w_embed, w_gcn, b_gcn, gamma, beta, fc_w, fc_b,
                *, use_tiled=None):
    # b_gcn is accepted for parameter parity with the PyTorch module but is mathematically
    # cancelled by the training-mode BatchNorm mean subtraction -> never shipped to device.
    # TODO(synk): if an eval-mode / running-stats BN variant is ever wired in, reinstate it.
    del b_gcn
    num_class = fc_w.shape[1]
    num_layers, embed_dim, _ = w_gcn.shape
    n = x.shape[0]

    d_pad = _round_up(embed_dim, LANE)
    c_pad = _round_up(num_class, LANE)

    # Lane-dense zero padding of the feature/class axes (exactly output-preserving:
    # padded gamma/beta/weights are zero, so padded columns stay identically zero).
    we = _pad_to(w_embed, (w_embed.shape[0], d_pad))
    wg = _pad_to(w_gcn, (num_layers, d_pad, d_pad))
    ga = _pad_to(gamma, (num_layers, 1, d_pad))
    be = _pad_to(beta, (num_layers, 1, d_pad))
    fw = _pad_to(fc_w, (d_pad, c_pad))
    fb = _pad_to(fc_b, (1, c_pad))

    if use_tiled is None:
        # Fused single-call path only while bf16 A_hat (plus node intermediates) comfortably
        # fits the smallest (v5e) default scoped-VMEM budget.
        use_tiled = (n * n * 2) > (2 << 20)

    if use_tiled:
        n_pad = _round_up(n, LANE)
        # TODO(synk): a cdiv grid with a masked remainder block would avoid this O(N^2)
        # pad copy when N is not already lane-aligned (no copy happens when N % 128 == 0).
        a_bf = _pad_to(a_hat, (n_pad, n_pad)).astype(jnp.bfloat16)
        p_bf = _pad_to(pool, (pool.shape[0], n_pad)).astype(jnp.bfloat16)
        x_p = _pad_to(x, (n_pad, x.shape[1]))
        out = _gnn_forward_tiled(x_p, a_bf, p_bf, we, wg, ga, be, fw, fb, n)
    else:
        out = _gnn_forward_fused(x, a_hat.astype(jnp.bfloat16), pool.astype(jnp.bfloat16),
                                 we, wg, ga, be, fw, fb, num_layers)
    return out[:, :num_class]


# ---------------------------------------------------------------------------
# pure-JAX reference (keeps the bias + canonical two-pass variance so it independently
# verifies the bias-cancellation and fused-statistics simplifications)
# ---------------------------------------------------------------------------

def gnn_reference(x, a_hat, pool, w_embed, w_gcn, b_gcn, gamma, beta, fc_w, fc_b):
    h = _mm(x, w_embed)
    num_layers = w_gcn.shape[0]
    for l in range(num_layers):
        t = _mm(h, w_gcn[l])
        t = _mm(a_hat, t) + b_gcn[l]
        mean = jnp.mean(t, axis=0, keepdims=True)
        var = jnp.mean((t - mean) ** 2, axis=0, keepdims=True)
        t = (t - mean) * lax.rsqrt(var + BN_EPS) * gamma[l] + beta[l]
        if l < num_layers - 1:
            t = jnp.maximum(t, 0.0)
        h = t
    hp = _mm(pool, h)
    return _mm(hp, fc_w) + fc_b


# ---------------------------------------------------------------------------
# glue: graph preprocessing (plain JAX)
# ---------------------------------------------------------------------------

def build_a_hat(edge_index, num_nodes):
    """Dense D^{-1/2}(A + I)D^{-1/2}, matching PyG gcn_norm(add_self_loops=True)."""
    src = edge_index[0]
    dst = edge_index[1]
    a = jnp.zeros((num_nodes, num_nodes), jnp.float32).at[dst, src].add(1.0)
    a = a + jnp.eye(num_nodes, dtype=jnp.float32)
    deg = jnp.sum(a, axis=1)
    dinv = jnp.where(deg > 0, 1.0 / jnp.sqrt(deg), 0.0)
    return dinv[:, None] * a * dinv[None, :]


def build_pool(batch, num_graphs, num_nodes):
    """One-hot pooling matrix P[g, n] = 1 iff batch[n] == g (sum pool == P @ h)."""
    return (batch[None, :] == jnp.arange(num_graphs)[:, None]).astype(jnp.float32)


# ---------------------------------------------------------------------------
# demo / self-check
# ---------------------------------------------------------------------------

if __name__ == "__main__":
    def make_ring_problem(key, num_graphs, nodes_per_graph, in_dim, embed_dim,
                          num_layers, num_class):
        n = num_graphs * nodes_per_graph
        keys = jax.random.split(key, 8)
        x = jax.random.normal(keys[0], (n, in_dim), dtype=jnp.float32)
        edges = []
        for g in range(num_graphs):
            base = g * nodes_per_graph
            for i in range(nodes_per_graph):
                j = (i + 1) % nodes_per_graph
                edges.append((base + i, base + j))
                edges.append((base + j, base + i))
        edge_index = jnp.asarray(edges, dtype=jnp.int32).T
        batch = jnp.repeat(jnp.arange(num_graphs, dtype=jnp.int32), nodes_per_graph)
        params = dict(
            w_embed=0.1 * jax.random.normal(keys[1], (in_dim, embed_dim), jnp.float32),
            w_gcn=0.1 * jax.random.normal(keys[2], (num_layers, embed_dim, embed_dim), jnp.float32),
            b_gcn=0.05 * jax.random.normal(keys[3], (num_layers, 1, embed_dim), jnp.float32),
            gamma=1.0 + 0.1 * jax.random.normal(keys[4], (num_layers, 1, embed_dim), jnp.float32),
            beta=0.1 * jax.random.normal(keys[5], (num_layers, 1, embed_dim), jnp.float32),
            fc_w=0.1 * jax.random.normal(keys[6], (embed_dim, num_class), jnp.float32),
            fc_b=0.05 * jax.random.normal(keys[7], (1, num_class), jnp.float32),
        )
        a_hat = build_a_hat(edge_index, n)
        pool_m = build_pool(batch, num_graphs, n)
        return x, a_hat, pool_m, params

    key = jax.random.PRNGKey(0)
    k_small, k_big = jax.random.split(key)

    # --- small case: single fused, lane-padded, ungridded pallas_call --------
    x, a_hat, pool_m, p = make_ring_problem(k_small, num_graphs=2, nodes_per_graph=8,
                                            in_dim=4, embed_dim=32, num_layers=2,
                                            num_class=3)
    out_small = jax.block_until_ready(gnn_forward(x, a_hat, pool_m, **p))
    ref_small = jax.block_until_ready(gnn_reference(x, a_hat, pool_m, **p))
    assert out_small.shape == (2, 3)
    assert bool(jnp.all(jnp.isfinite(out_small)))
    assert bool(jnp.allclose(out_small, ref_small, rtol=5e-3, atol=5e-3))

    # --- larger case: gridded, resident-T streamed aggregation ---------------
    x2, a2, pool2, p2 = make_ring_problem(k_big, num_graphs=4, nodes_per_graph=256,
                                          in_dim=6, embed_dim=64, num_layers=2,
                                          num_class=5)
    out_big = jax.block_until_ready(gnn_forward(x2, a2, pool2, use_tiled=True, **p2))
    ref_big = jax.block_until_ready(gnn_reference(x2, a2, pool2, **p2))
    assert out_big.shape == (4, 5)
    assert bool(jnp.all(jnp.isfinite(out_big)))
    assert bool(jnp.allclose(out_big, ref_big, rtol=1e-2, atol=1e-2))

    print("KERNEL_OK")
</pallas_src>

<mosaic_0001>
module attributes {stable_mosaic.version = 11 : i64} {
  func.func @_gnn_fused_kernel(%arg0: memref<16x4xf32, #tpu.memory_space<vmem>>, %arg1: memref<16x16xbf16, #tpu.memory_space<vmem>>, %arg2: memref<2x16xbf16, #tpu.memory_space<vmem>>, %arg3: memref<4x128xf32, #tpu.memory_space<vmem>>, %arg4: memref<2x128x128xf32, #tpu.memory_space<vmem>>, %arg5: memref<2x1x128xf32, #tpu.memory_space<vmem>>, %arg6: memref<2x1x128xf32, #tpu.memory_space<vmem>>, %arg7: memref<128x128xf32, #tpu.memory_space<vmem>>, %arg8: memref<1x128xf32, #tpu.memory_space<vmem>>, %arg9: memref<2x128xf32, #tpu.memory_space<vmem>>) attributes {dimension_semantics = [], scalar_prefetch = 0 : i64, scratch_operands = 0 : i64, tpu.core_type = #tpu.core_type<tc>} {
    %c0 = arith.constant 0 : index
    %c0_0 = arith.constant 0 : index
    %0 = vector.load %arg0[%c0, %c0_0] : memref<16x4xf32, #tpu.memory_space<vmem>>, vector<16x4xf32>
    %c0_1 = arith.constant 0 : index
    %c0_2 = arith.constant 0 : index
    %1 = vector.load %arg3[%c0_1, %c0_2] : memref<4x128xf32, #tpu.memory_space<vmem>>, vector<4x128xf32>
    %2 = arith.truncf %0 : vector<16x4xf32> to vector<16x4xbf16>
    %3 = arith.truncf %1 : vector<4x128xf32> to vector<4x128xbf16>
    %cst = arith.constant dense<0.000000e+00> : vector<16x128xf32>
    %4 = tpu.matmul %2, %3, %cst {dimension_numbers = #tpu.dot_dimension_numbers<[1], [0], [0], [1], [0, 0, 1, 1], [], []>} : vector<16x4xbf16>, vector<4x128xbf16>, vector<16x128xf32> -> vector<16x128xf32>
    %c0_3 = arith.constant 0 : index
    %c0_4 = arith.constant 0 : index
    %5 = vector.load %arg1[%c0_3, %c0_4] : memref<16x16xbf16, #tpu.memory_space<vmem>>, vector<16x16xbf16>
    %c0_5 = arith.constant 0 : index
    %c0_6 = arith.constant 0 : index
    %c0_7 = arith.constant 0 : index
    %6 = vector.load %arg4[%c0_5, %c0_6, %c0_7] : memref<2x128x128xf32, #tpu.memory_space<vmem>>, vector<1x128x128xf32>
    %7 = vector.shape_cast %6 : vector<1x128x128xf32> to vector<128x128xf32>
    %8 = arith.truncf %4 : vector<16x128xf32> to vector<16x128xbf16>
    %9 = arith.truncf %7 : vector<128x128xf32> to vector<128x128xbf16>
    %cst_8 = arith.constant dense<0.000000e+00> : vector<16x128xf32>
    %10 = tpu.matmul %8, %9, %cst_8 {dimension_numbers = #tpu.dot_dimension_numbers<[1], [0], [0], [1], [0, 0, 1, 1], [], []>} : vector<16x128xbf16>, vector<128x128xbf16>, vector<16x128xf32> -> vector<16x128xf32>
    %11 = arith.truncf %10 : vector<16x128xf32> to vector<16x128xbf16>
    %cst_9 = arith.constant dense<0.000000e+00> : vector<16x128xf32>
    %12 = tpu.matmul %5, %11, %cst_9 {dimension_numbers = #tpu.dot_dimension_numbers<[1], [0], [0], [1], [0, 0, 1, 1], [], []>} : vector<16x16xbf16>, vector<16x128xbf16>, vector<16x128xf32> -> vector<16x128xf32>
    %cst_10 = arith.constant dense<0.000000e+00> : vector<128xf32>
    %13 = vector.multi_reduction <add>, %12, %cst_10 [0] : vector<16x128xf32> to vector<128xf32>
    %14 = vector.shape_cast %13 : vector<128xf32> to vector<1x128xf32>
    %cst_11 = arith.constant 1.600000e+01 : f32
    %15 = vector.broadcast %cst_11 : f32 to vector<1x128xf32>
    %16 = arith.divf %14, %15 : vector<1x128xf32>
    %17 = vector.broadcast %16 : vector<1x128xf32> to vector<16x128xf32>
    %18 = arith.subf %12, %17 : vector<16x128xf32>
    %19 = arith.mulf %18, %18 : vector<16x128xf32>
    %cst_12 = arith.constant dense<0.000000e+00> : vector<128xf32>
    %20 = vector.multi_reduction <add>, %19, %cst_12 [0] : vector<16x128xf32> to vector<128xf32>
    %21 = vector.shape_cast %20 : vector<128xf32> to vector<1x128xf32>
    %cst_13 = arith.constant 1.600000e+01 : f32
    %22 = vector.broadcast %cst_13 : f32 to vector<1x128xf32>
    %23 = arith.divf %21, %22 : vector<1x128xf32>
    %c0_14 = arith.constant 0 : index
    %c0_15 = arith.constant 0 : index
    %c0_16 = arith.constant 0 : index
    %24 = vector.load %arg5[%c0_14, %c0_15, %c0_16] : memref<2x1x128xf32, #tpu.memory_space<vmem>>, vector<1x1x128xf32>
    %25 = vector.shape_cast %24 : vector<1x1x128xf32> to vector<1x128xf32>
    %cst_17 = arith.constant 9.99999974E-6 : f32
    %26 = vector.broadcast %cst_17 : f32 to vector<1x128xf32>
    %27 = arith.addf %23, %26 : vector<1x128xf32>
    %28 = math.rsqrt %27 : vector<1x128xf32>
    %29 = arith.mulf %25, %28 : vector<1x128xf32>
    %30 = vector.broadcast %29 : vector<1x128xf32> to vector<16x128xf32>
    %31 = arith.mulf %18, %30 : vector<16x128xf32>
    %c0_18 = arith.constant 0 : index
    %c0_19 = arith.constant 0 : index
    %c0_20 = arith.constant 0 : index
    %32 = vector.load %arg6[%c0_18, %c0_19, %c0_20] : memref<2x1x128xf32, #tpu.memory_space<vmem>>, vector<1x1x128xf32>
    %33 = vector.shape_cast %32 : vector<1x1x128xf32> to vector<1x128xf32>
    %34 = vector.broadcast %33 : vector<1x128xf32> to vector<16x128xf32>
    %35 = arith.addf %31, %34 : vector<16x128xf32>
    %cst_21 = arith.constant 0.000000e+00 : f32
    %36 = vector.broadcast %cst_21 : f32 to vector<16x128xf32>
    %37 = arith.maximumf %35, %36 : vector<16x128xf32>
    %c1 = arith.constant 1 : index
    %c0_22 = arith.constant 0 : index
    %c0_23 = arith.constant 0 : index
    %38 = vector.load %arg4[%c1, %c0_22, %c0_23] : memref<2x128x128xf32, #tpu.memory_space<vmem>>, vector<1x128x128xf32>
    %39 = vector.shape_cast %38 : vector<1x128x128xf32> to vector<128x128xf32>
    %40 = arith.truncf %37 : vector<16x128xf32> to vector<16x128xbf16>
    %41 = arith.truncf %39 : vector<128x128xf32> to vector<128x128xbf16>
    %cst_24 = arith.constant dense<0.000000e+00> : vector<16x128xf32>
    %42 = tpu.matmul %40, %41, %cst_24 {dimension_numbers = #tpu.dot_dimension_numbers<[1], [0], [0], [1], [0, 0, 1, 1], [], []>} : vector<16x128xbf16>, vector<128x128xbf16>, vector<16x128xf32> -> vector<16x128xf32>
    %43 = arith.truncf %42 : vector<16x128xf32> to vector<16x128xbf16>
    %cst_25 = arith.constant dense<0.000000e+00> : vector<16x128xf32>
    %44 = tpu.matmul %5, %43, %cst_25 {dimension_numbers = #tpu.dot_dimension_numbers<[1], [0], [0], [1], [0, 0, 1, 1], [], []>} : vector<16x16xbf16>, vector<16x128xbf16>, vector<16x128xf32> -> vector<16x128xf32>
    %cst_26 = arith.constant dense<0.000000e+00> : vector<128xf32>
    %45 = vector.multi_reduction <add>, %44, %cst_26 [0] : vector<16x128xf32> to vector<128xf32>
    %46 = vector.shape_cast %45 : vector<128xf32> to vector<1x128xf32>
    %cst_27 = arith.constant 1.600000e+01 : f32
    %47 = vector.broadcast %cst_27 : f32 to vector<1x128xf32>
    %48 = arith.divf %46, %47 : vector<1x128xf32>
    %49 = vector.broadcast %48 : vector<1x128xf32> to vector<16x128xf32>
    %50 = arith.subf %44, %49 : vector<16x128xf32>
    %51 = arith.mulf %50, %50 : vector<16x128xf32>
    %cst_28 = arith.constant dense<0.000000e+00> : vector<128xf32>
    %52 = vector.multi_reduction <add>, %51, %cst_28 [0] : vector<16x128xf32> to vector<128xf32>
    %53 = vector.shape_cast %52 : vector<128xf32> to vector<1x128xf32>
    %cst_29 = arith.constant 1.600000e+01 : f32
    %54 = vector.broadcast %cst_29 : f32 to vector<1x128xf32>
    %55 = arith.divf %53, %54 : vector<1x128xf32>
    %c1_30 = arith.constant 1 : index
    %c0_31 = arith.constant 0 : index
    %c0_32 = arith.constant 0 : index
    %56 = vector.load %arg5[%c1_30, %c0_31, %c0_32] : memref<2x1x128xf32, #tpu.memory_space<vmem>>, vector<1x1x128xf32>
    %57 = vector.shape_cast %56 : vector<1x1x128xf32> to vector<1x128xf32>
    %cst_33 = arith.constant 9.99999974E-6 : f32
    %58 = vector.broadcast %cst_33 : f32 to vector<1x128xf32>
    %59 = arith.addf %55, %58 : vector<1x128xf32>
    %60 = math.rsqrt %59 : vector<1x128xf32>
    %61 = arith.mulf %57, %60 : vector<1x128xf32>
    %62 = vector.broadcast %61 : vector<1x128xf32> to vector<16x128xf32>
    %63 = arith.mulf %50, %62 : vector<16x128xf32>
    %c1_34 = arith.constant 1 : index
    %c0_35 = arith.constant 0 : index
    %c0_36 = arith.constant 0 : index
    %64 = vector.load %arg6[%c1_34, %c0_35, %c0_36] : memref<2x1x128xf32, #tpu.memory_space<vmem>>, vector<1x1x128xf32>
    %65 = vector.shape_cast %64 : vector<1x1x128xf32> to vector<1x128xf32>
    %66 = vector.broadcast %65 : vector<1x128xf32> to vector<16x128xf32>
    %67 = arith.addf %63, %66 : vector<16x128xf32>
    %c0_37 = arith.constant 0 : index
    %c0_38 = arith.constant 0 : index
    %68 = vector.load %arg2[%c0_37, %c0_38] : memref<2x16xbf16, #tpu.memory_space<vmem>>, vector<2x16xbf16>
    %69 = arith.truncf %67 : vector<16x128xf32> to vector<16x128xbf16>
    %cst_39 = arith.constant dense<0.000000e+00> : vector<2x128xf32>
    %70 = tpu.matmul %68, %69, %cst_39 {dimension_numbers = #tpu.dot_dimension_numbers<[1], [0], [0], [1], [0, 0, 1, 1], [], []>} : vector<2x16xbf16>, vector<16x128xbf16>, vector<2x128xf32> -> vector<2x128xf32>
    %c0_40 = arith.constant 0 : index
    %c0_41 = arith.constant 0 : index
    %71 = vector.load %arg7[%c0_40, %c0_41] : memref<128x128xf32, #tpu.memory_space<vmem>>, vector<128x128xf32>
    %72 = arith.truncf %70 : vector<2x128xf32> to vector<2x128xbf16>
    %73 = arith.truncf %71 : vector<128x128xf32> to vector<128x128xbf16>
    %cst_42 = arith.constant dense<0.000000e+00> : vector<2x128xf32>
    %74 = tpu.matmul %72, %73, %cst_42 {dimension_numbers = #tpu.dot_dimension_numbers<[1], [0], [0], [1], [0, 0, 1, 1], [], []>} : vector<2x128xbf16>, vector<128x128xbf16>, vector<2x128xf32> -> vector<2x128xf32>
    %c0_43 = arith.constant 0 : index
    %c0_44 = arith.constant 0 : index
    %75 = vector.load %arg8[%c0_43, %c0_44] : memref<1x128xf32, #tpu.memory_space<vmem>>, vector<1x128xf32>
    %76 = vector.broadcast %75 : vector<1x128xf32> to vector<2x128xf32>
    %77 = arith.addf %74, %76 : vector<2x128xf32>
    %c0_45 = arith.constant 0 : index
    %c0_46 = arith.constant 0 : index
    %78 = vector.load %arg9[%c0_45, %c0_46] : memref<2x128xf32, #tpu.memory_space<vmem>>, vector<2x128xf32>
    tpu.vector_store %arg9[%c0_45, %c0_46], %77 {strides = array<i32>} : memref<2x128xf32, #tpu.memory_space<vmem>>, vector<2x128xf32>,
    return
  }
}

</mosaic_0001>

<llo_original>
// kernel: tpu_custom_call.1
$region0: #{tpu_custom_call.1}
  #allocation0 [shape = 'u32[]', space=smem, size = 0x4, offset = 0x4, fixed_abs, tag = 'smem constant byte address 0x4 - core index']
  #allocation1 [shape = 'u32[144,128]{1,0:T(1,128)}', space=vmem, size = 0x12000, scoped, tag = 'internal scratch']
  %s0 = inlined_call_operand.vmem [shape: f32[16,4], index: 0, kind: input, shape index: {}]
  %s1 = inlined_call_operand.vmem [shape: bf16[16,16], index: 1, kind: input, shape index: {}]
  %s2 = inlined_call_operand.vmem [shape: bf16[2,16], index: 2, kind: input, shape index: {}]
  %s3 = inlined_call_operand.vmem [shape: f32[4,128], index: 3, kind: input, shape index: {}]
  %s4 = inlined_call_operand.hbm [shape: f32[2,128,128], index: 4, kind: input, shape index: {}]
  %s5 = inlined_call_operand.vmem [shape: f32[2,1,128], index: 5, kind: input, shape index: {}]
  %s6 = inlined_call_operand.vmem [shape: f32[2,1,128], index: 6, kind: input, shape index: {}]
  %s7 = inlined_call_operand.hbm [shape: f32[128,128], index: 7, kind: input, shape index: {}]
  %s8 = inlined_call_operand.vmem [shape: f32[1,128], index: 8, kind: input, shape index: {}]
  %s9 = inlined_call_operand.hbm [shape: f32[2,128], index: 9, kind: output, shape index: {}]
  %s10 = sld [smem:[#allocation0]]
  $region54: #{tpu_custom_call.1} parent=0
    _
  %s12 = ssub.s32 1, %s10
  %s13 = scalar_select 0, %s12, %s10
  $region1: #{tpu_custom_call.1} parent=0
    #allocation2 [shape = 'u8[131072]{0}', space=vmem, size = 0x20000, scoped, tag = 'input window, operand 4, single buffered']
    #allocation3 [shape = 's32[1]{0}', space=sflag, size = 0x4, scoped, tag = 'scoped memory for tpu_custom_call.1']
    #allocation4 [shape = 's32[1]{0}', space=sflag, size = 0x4, scoped, tag = 'scoped memory for tpu_custom_call.1']
    #allocation5 [shape = 'u8[65536]{0}', space=vmem, size = 0x10000, scoped, tag = 'input window, operand 7, single buffered']
    #allocation6 [shape = 's32[1]{0}', space=sflag, size = 0x4, scoped, tag = 'scoped memory for tpu_custom_call.1']
    #allocation7 [shape = 'u8[1024]{0}', space=vmem, size = 0x400, scoped, tag = 'output window, operand 0, single buffered']
    %14 = vsyncpa [#allocation3], 0
    %15 = vsyncpa [#allocation6], 0
    %16 = vsyncpa [#allocation4], 0
    // Predicated region
    $region2: #{tpu_custom_call.1} parent=1 // pred_check
      _
    $region3: #{tpu_custom_call.1} parent=1 // pred_check_branch
      %18 = sbr.rel (0) target = $region5
    $region4: #{tpu_custom_call.1} parent=1 // pred_region
      _
    $region5: #{tpu_custom_call.1} parent=1 // pred_fallthru
      _
    // Predicated region
    $region6: #{tpu_custom_call.1} parent=1 // pred_check
      _
    $region7: #{tpu_custom_call.1} parent=1 // pred_check_branch
      %20 = sbr.rel (0) target = $region9
    $region8: #{tpu_custom_call.1} parent=1 // pred_region
      _
    $region9: #{tpu_custom_call.1} parent=1 // pred_fallthru
      _
    // Predicated region
    $region10: #{tpu_custom_call.1} parent=1 // pred_check
      _
    $region11: #{tpu_custom_call.1} parent=1 // pred_check_branch
      %22 = sbr.rel (0) target = $region13
    $region12: #{tpu_custom_call.1} parent=1 // pred_region
      _
    $region13: #{tpu_custom_call.1} parent=1 // pred_fallthru
      _
    // Predicated region
    $region14: #{tpu_custom_call.1} parent=1 // pred_check
      _
    $region15: #{tpu_custom_call.1} parent=1 // pred_check_branch
      %24 = sbr.rel (0) target = $region17
    $region16: #{tpu_custom_call.1} parent=1 // pred_region
      _
    $region17: #{tpu_custom_call.1} parent=1 // pred_fallthru
      _
    // Predicated region
    $region18: #{tpu_custom_call.1} parent=1 // pred_check
      _
    $region19: #{tpu_custom_call.1} parent=1 // pred_check_branch
      %26 = sbr.rel (0) target = $region21
    $region20: #{tpu_custom_call.1} parent=1 // pred_region
      %s28 = ssub.s32 4096, 4096
      %29 = vsyncadd [#allocation3], %s28
      %s30 = sshll.u32 [#allocation2], 4
      %s31 = int_to_ptr.vmem [resolvable:$true] %s30
      %36 = dma.hbm_to_vmem [thread:$0]  %s4, 4096, %s31, [#allocation3], 128, 128, 8
    $region21: #{tpu_custom_call.1} parent=1 // pred_fallthru
      _
    // Predicated region
    $region22: #{tpu_custom_call.1} parent=1 // pred_check
      _
    $region23: #{tpu_custom_call.1} parent=1 // pred_check_branch
      %38 = sbr.rel (0) target = $region25
    $region24: #{tpu_custom_call.1} parent=1 // pred_region
      _
    $region25: #{tpu_custom_call.1} parent=1 // pred_fallthru
      _
    // Predicated region
    $region26: #{tpu_custom_call.1} parent=1 // pred_check
      _
    $region27: #{tpu_custom_call.1} parent=1 // pred_check_branch
      %40 = sbr.rel (0) target = $region29
    $region28: #{tpu_custom_call.1} parent=1 // pred_region
      _
    $region29: #{tpu_custom_call.1} parent=1 // pred_fallthru
      _
    // Predicated region
    $region30: #{tpu_custom_call.1} parent=1 // pred_check
      _
    $region31: #{tpu_custom_call.1} parent=1 // pred_check_branch
      %42 = sbr.rel (0) target = $region33
    $region32: #{tpu_custom_call.1} parent=1 // pred_region
      %s44 = ssub.s32 2048, 2048
      %45 = vsyncadd [#allocation6], %s44
      %s46 = sshll.u32 [#allocation5], 4
      %s47 = int_to_ptr.vmem [resolvable:$true] %s46
      %52 = dma.hbm_to_vmem [thread:$0]  %s7, 2048, %s47, [#allocation6], 128, 128, 8
    $region33: #{tpu_custom_call.1} parent=1 // pred_fallthru
      _
    // Predicated region
    $region34: #{tpu_custom_call.1} parent=1 // pred_check
      _
    $region35: #{tpu_custom_call.1} parent=1 // pred_check_branch
      %54 = sbr.rel (0) target = $region37
    $region36: #{tpu_custom_call.1} parent=1 // pred_region
      _
    $region37: #{tpu_custom_call.1} parent=1 // pred_fallthru
      _
    // Predicated region
    $region38: #{tpu_custom_call.1} parent=1 // pred_check
      _
    $region39: #{tpu_custom_call.1} parent=1 // pred_check_branch
      %56 = sbr.rel (0) target = $region41
    $region40: #{tpu_custom_call.1} parent=1 // pred_region
      %57 = dma.done [#allocation3], 4096
    $region41: #{tpu_custom_call.1} parent=1 // pred_fallthru
      _
    // Predicated region
    $region42: #{tpu_custom_call.1} parent=1 // pred_check
      _
    $region43: #{tpu_custom_call.1} parent=1 // pred_check_branch
      %59 = sbr.rel (0) target = $region45
    $region44: #{tpu_custom_call.1} parent=1 // pred_region
      %60 = dma.done [#allocation6], 2048
    $region45: #{tpu_custom_call.1} parent=1 // pred_fallthru
      _
    %v62 = vld [vmem:[%s0] sm:$0xff]
    %v63 = vld [vmem:[%s0 + $0x8] sm:$0xff]
    %v64 = vld [vmem:[%s3] sm:$0xf]
    %v65 = vpack.c.bf16 %v63, %v62
    %v66 = vpack.c.bf16 %v64, %v64
    %vm67 = vcmask 31744
    %v69 = vsel %vm67, %v65, 0
    %vm71 = vcmask 1041408
    %v73 = vsel %vm71, %v66, 0
    %75 = vmatprep.subr.bf16.mxu0 0
    %76 = vmatpush1.bf16.msra.mxu0 0
    %77 = vmatprep.subr.bf16.mxu0 0
    %78 = vmatpush1.bf16.msra.mxu0 0
    %79 = vmatprep.subr.bf16.mxu0 0
    %80 = vmatpush1.bf16.msra.mxu0 0
    %81 = vmatprep.subr.bf16.mxu0 0
    %82 = vmatpush1.bf16.msra.mxu0 0
    %83 = vmatprep.subr.bf16.mxu0 0
    %84 = vmatpush1.bf16.msra.mxu0 0
    %85 = vmatprep.subr.bf16.mxu0 0
    %86 = vmatpush1.bf16.msra.mxu0 0
    %87 = vmatprep.subr.bf16.mxu0 0
    %88 = vmatpush1.bf16.msra.mxu0 0
    %89 = vmatprep.subr.bf16.mxu0 0
    %90 = vmatpush1.bf16.msra.mxu0 %v73
    %91 = vmatprep.subr.bf16.mxu0 0
    %92 = vmatpush2.bf16.msra.mxu0 0
    %93 = vmatprep.subr.bf16.mxu0 0
    %94 = vmatpush2.bf16.msra.mxu0 0
    %95 = vmatprep.subr.bf16.mxu0 0
    %96 = vmatpush2.bf16.msra.mxu0 0
    %97 = vmatprep.subr.bf16.mxu0 0
    %98 = vmatpush2.bf16.msra.mxu0 0
    %99 = vmatprep.subr.bf16.mxu0 0
    %100 = vmatpush2.bf16.msra.mxu0 0
    %101 = vmatprep.subr.bf16.mxu0 0
    %102 = vmatpush2.bf16.msra.mxu0 0
    %103 = vmatprep.subr.bf16.mxu0 0
    %104 = vmatpush2.bf16.msra.mxu0 0
    %105 = vmatprep.subr.bf16.mxu0 0
    %106 = vmatpush2.bf16.msra.mxu0 0
    %107 = vmatprep.mubr.bf16.mxu0 0
    %108 = vmatmul.mubr.bf16.gmra.mxu0 %v69
    %v109 = vpop.f32.mrf.mxu0
    %v110 = vadd.f32 0.0, %v109
    %v111 = vpop.f32.mrf.mxu0
    %v112 = vpop.f32.mrf.mxu0
    %v113 = vadd.f32 0.0, %v112
    %v114 = vpop.f32.mrf.mxu0
    %115 = vdwg.mxu0
    %v116 = vld [vmem:[%s1] sm:$0xf]
    %v117 = vld [vmem:[%s1 + $0x4] sm:$0xf]
    %v118 = vld [vmem:[#allocation2] sm:$0xff]
    %v119 = vld [vmem:[#allocation2 + $0x8] sm:$0xff]
    %v120 = vld [vmem:[#allocation2 + $0x10] sm:$0xff]
    %v121 = vld [vmem:[#allocation2 + $0x18] sm:$0xff]
    %v122 = vld [vmem:[#allocation2 + $0x20] sm:$0xff]
    %v123 = vld [vmem:[#allocation2 + $0x28] sm:$0xff]
    %v124 = vld [vmem:[#allocation2 + $0x30] sm:$0xff]
    %v125 = vld [vmem:[#allocation2 + $0x38] sm:$0xff]
    %v126 = vld [vmem:[#allocation2 + $0x40] sm:$0xff]
    %v127 = vld [vmem:[#allocation2 + $0x48] sm:$0xff]
    %v128 = vld [vmem:[#allocation2 + $0x50] sm:$0xff]
    %v129 = vld [vmem:[#allocation2 + $0x58] sm:$0xff]
    %v130 = vld [vmem:[#allocation2 + $0x60] sm:$0xff]
    %v131 = vld [vmem:[#allocation2 + $0x68] sm:$0xff]
    %v132 = vld [vmem:[#allocation2 + $0x70] sm:$0xff]
    %v133 = vld [vmem:[#allocation2 + $0x78] sm:$0xff]
    %v134 = vpack.c.bf16 %v113, %v110
    %v135 = vpack.c.bf16 %v119, %v118
    %v136 = vpack.c.bf16 %v121, %v120
    %v137 = vpack.c.bf16 %v123, %v122
    %v138 = vpack.c.bf16 %v125, %v124
    %v139 = vpack.c.bf16 %v127, %v126
    %v140 = vpack.c.bf16 %v129, %v128
    %v141 = vpack.c.bf16 %v131, %v130
    %v142 = vpack.c.bf16 %v133, %v132
    %143 = vmatprep.subr.bf16.mxu0 0
    %144 = vmatpush1.bf16.msra.mxu0 %v142
    %145 = vmatprep.subr.bf16.mxu0 0
    %146 = vmatpush1.bf16.msra.mxu0 %v141
    %147 = vmatprep.subr.bf16.mxu0 0
    %148 = vmatpush1.bf16.msra.mxu0 %v140
    %149 = vmatprep.subr.bf16.mxu0 0
    %150 = vmatpush1.bf16.msra.mxu0 %v139
    %151 = vmatprep.subr.bf16.mxu0 0
    %152 = vmatpush1.bf16.msra.mxu0 %v138
    %153 = vmatprep.subr.bf16.mxu0 0
    %154 = vmatpush1.bf16.msra.mxu0 %v137
    %155 = vmatprep.subr.bf16.mxu0 0
    %156 = vmatpush1.bf16.msra.mxu0 %v136
    %157 = vmatprep.subr.bf16.mxu0 0
    %158 = vmatpush1.bf16.msra.mxu0 %v135
    %159 = vmatprep.subr.bf16.mxu0 0
    %160 = vmatpush2.bf16.msra.mxu0 0
    %161 = vmatprep.subr.bf16.mxu0 0
    %162 = vmatpush2.bf16.msra.mxu0 0
    %163 = vmatprep.subr.bf16.mxu0 0
    %164 = vmatpush2.bf16.msra.mxu0 0
    %165 = vmatprep.subr.bf16.mxu0 0
    %166 = vmatpush2.bf16.msra.mxu0 0
    %167 = vmatprep.subr.bf16.mxu0 0
    %168 = vmatpush2.bf16.msra.mxu0 0
    %169 = vmatprep.subr.bf16.mxu0 0
    %170 = vmatpush2.bf16.msra.mxu0 0
    %171 = vmatprep.subr.bf16.mxu0 0
    %172 = vmatpush2.bf16.msra.mxu0 0
    %173 = vmatprep.subr.bf16.mxu0 0
    %174 = vmatpush2.bf16.msra.mxu0 0
    %175 = vmatprep.mubr.bf16.mxu0 0
    %176 = vmatmul.mubr.bf16.gmra.mxu0 %v134
    %v177 = vpop.f32.mrf.mxu0
    %v178 = vadd.f32 0.0, %v177
    %v179 = vpop.f32.mrf.mxu0
    %v180 = vpop.f32.mrf.mxu0
    %v181 = vadd.f32 0.0, %v180
    %v182 = vpop.f32.mrf.mxu0
    %183 = vdwg.mxu0
    %v184 = vpack.c.bf16 %v181, %v178
    %v187 = vunpack.c.l.b16 %v116
    %v188 = vunpack.c.l.b16 %v117
    %v189 = vpack.c.b16 %v188, %v187
    %vm190 = vcmask 130048
    %v192 = vsel %vm190, %v189, 0
    %194 = vmatprep.subr.bf16.mxu0 0
    %195 = vmatpush1.bf16.msra.mxu0 0
    %196 = vmatprep.subr.bf16.mxu0 0
    %197 = vmatpush1.bf16.msra.mxu0 0
    %198 = vmatprep.subr.bf16.mxu0 0
    %199 = vmatpush1.bf16.msra.mxu0 0
    %200 = vmatprep.subr.bf16.mxu0 0
    %201 = vmatpush1.bf16.msra.mxu0 0
    %202 = vmatprep.subr.bf16.mxu0 0
    %203 = vmatpush1.bf16.msra.mxu0 0
    %204 = vmatprep.subr.bf16.mxu0 0
    %205 = vmatpush1.bf16.msra.mxu0 0
    %206 = vmatprep.subr.bf16.mxu0 0
    %207 = vmatpush1.bf16.msra.mxu0 0
    %208 = vmatprep.subr.bf16.mxu0 0
    %209 = vmatpush1.bf16.msra.mxu0 %v184
    %210 = vmatprep.subr.bf16.mxu0 0
    %211 = vmatpush2.bf16.msra.mxu0 0
    %212 = vmatprep.subr.bf16.mxu0 0
    %213 = vmatpush2.bf16.msra.mxu0 0
    %214 = vmatprep.subr.bf16.mxu0 0
    %215 = vmatpush2.bf16.msra.mxu0 0
    %216 = vmatprep.subr.bf16.mxu0 0
    %217 = vmatpush2.bf16.msra.mxu0 0
    %218 = vmatprep.subr.bf16.mxu0 0
    %219 = vmatpush2.bf16.msra.mxu0 0
    %220 = vmatprep.subr.bf16.mxu0 0
    %221 = vmatpush2.bf16.msra.mxu0 0
    %222 = vmatprep.subr.bf16.mxu0 0
    %223 = vmatpush2.bf16.msra.mxu0 0
    %224 = vmatprep.subr.bf16.mxu0 0
    %225 = vmatpush2.bf16.msra.mxu0 0
    %226 = vmatprep.mubr.bf16.mxu0 0
    %227 = vmatmul.mubr.bf16.gmra.mxu0 %v192
    %v228 = vpop.f32.mrf.mxu0
    %v229 = vadd.f32 0.0, %v228
    %v230 = vpop.f32.mrf.mxu0
    %v231 = vpop.f32.mrf.mxu0
    %v232 = vadd.f32 0.0, %v231
    %v233 = vpop.f32.mrf.mxu0
    %234 = vdwg.mxu0
    %v235 = vadd.f32 %v229, %v232
    %v236 = vrot.slane %v235, 4
    %v237 = vadd.f32 %v235, %v236
    %v238 = vrot.slane %v237, 2
    %v239 = vadd.f32 %v237, %v238
    %v240 = vrot.slane %v239, 1
    %v241 = vadd.f32 %v239, %v240
    %v242 = vrcp.pop 16.0
    %v243 = vmul.f32 %v241, %v242
    %v244 = vsub.f32 %v229, %v243
    %v245 = vsub.f32 %v232, %v243
    %v246 = vmul.f32 %v244, %v244
    %v247 = vmul.f32 %v245, %v245
    %v248 = vadd.f32 %v246, %v247
    %v249 = vrot.slane %v248, 4
    %v250 = vadd.f32 %v248, %v249
    %v251 = vrot.slane %v250, 2
    %v252 = vadd.f32 %v250, %v251
    %v253 = vrot.slane %v252, 1
    %v254 = vadd.f32 %v252, %v253
    %v255 = vmul.f32 %v254, %v242
    %v256 = vld [vmem:[%s5] sm:$0x1]
    %v257 = vadd.f32 %v255, 1e-05
    %v258 = vrsqrt.pop %v257
    %v259 = vmul.f32 %v256, %v258
    %v261 = vlaneseq
    %v262 = vshrl.u32 %v261, 7
    %v263 = vsub.s32 0, %v262
    %v264 = vrot.slane %v259, %v263
    %v266 = vmul.f32 %v244, %v264
    %v267 = vmul.f32 %v245, %v264
    %v268 = vld [vmem:[%s6] sm:$0x1]
    %v270 = vlaneseq
    %v271 = vshrl.u32 %v270, 7
    %v272 = vsub.s32 0, %v271
    %v273 = vrot.slane %v268, %v272
    %v275 = vadd.f32 %v266, %v273
    %v276 = vadd.f32 %v267, %v273
    %v277 = vmax.f32 %v275, 0.0
    %v278 = vmax.f32 %v276, 0.0
    %s279 = scalar_lea.vmem [#allocation2], 128
    %v280 = vld [vmem:[%s279] sm:$0xff]
    %v281 = vld [vmem:[%s279 + $0x8] sm:$0xff]
    %v282 = vld [vmem:[%s279 + $0x10] sm:$0xff]
    %v283 = vld [vmem:[%s279 + $0x18] sm:$0xff]
    %v284 = vld [vmem:[%s279 + $0x20] sm:$0xff]
    %v285 = vld [vmem:[%s279 + $0x28] sm:$0xff]
    %v286 = vld [vmem:[%s279 + $0x30] sm:$0xff]
    %v287 = vld [vmem:[%s279 + $0x38] sm:$0xff]
    %v288 = vld [vmem:[%s279 + $0x40] sm:$0xff]
    %v289 = vld [vmem:[%s279 + $0x48] sm:$0xff]
    %v290 = vld [vmem:[%s279 + $0x50] sm:$0xff]
    %v291 = vld [vmem:[%s279 + $0x58] sm:$0xff]
    %v292 = vld [vmem:[%s279 + $0x60] sm:$0xff]
    %v293 = vld [vmem:[%s279 + $0x68] sm:$0xff]
    %v294 = vld [vmem:[%s279 + $0x70] sm:$0xff]
    %v295 = vld [vmem:[%s279 + $0x78] sm:$0xff]
    %v296 = vpack.c.bf16 %v278, %v277
    %v297 = vpack.c.bf16 %v281, %v280
    %v298 = vpack.c.bf16 %v283, %v282
    %v299 = vpack.c.bf16 %v285, %v284
    %v300 = vpack.c.bf16 %v287, %v286
    %v301 = vpack.c.bf16 %v289, %v288
    %v302 = vpack.c.bf16 %v291, %v290
    %v303 = vpack.c.bf16 %v293, %v292
    %v304 = vpack.c.bf16 %v295, %v294
    %305 = vmatprep.subr.bf16.mxu0 0
    %306 = vmatpush1.bf16.msra.mxu0 %v304
    %307 = vmatprep.subr.bf16.mxu0 0
    %308 = vmatpush1.bf16.msra.mxu0 %v303
    %309 = vmatprep.subr.bf16.mxu0 0
    %310 = vmatpush1.bf16.msra.mxu0 %v302
    %311 = vmatprep.subr.bf16.mxu0 0
    %312 = vmatpush1.bf16.msra.mxu0 %v301
    %313 = vmatprep.subr.bf16.mxu0 0
    %314 = vmatpush1.bf16.msra.mxu0 %v300
    %315 = vmatprep.subr.bf16.mxu0 0
    %316 = vmatpush1.bf16.msra.mxu0 %v299
    %317 = vmatprep.subr.bf16.mxu0 0
    %318 = vmatpush1.bf16.msra.mxu0 %v298
    %319 = vmatprep.subr.bf16.mxu0 0
    %320 = vmatpush1.bf16.msra.mxu0 %v297
    %321 = vmatprep.subr.bf16.mxu0 0
    %322 = vmatpush2.bf16.msra.mxu0 0
    %323 = vmatprep.subr.bf16.mxu0 0
    %324 = vmatpush2.bf16.msra.mxu0 0
    %325 = vmatprep.subr.bf16.mxu0 0
    %326 = vmatpush2.bf16.msra.mxu0 0
    %327 = vmatprep.subr.bf16.mxu0 0
    %328 = vmatpush2.bf16.msra.mxu0 0
    %329 = vmatprep.subr.bf16.mxu0 0
    %330 = vmatpush2.bf16.msra.mxu0 0
    %331 = vmatprep.subr.bf16.mxu0 0
    %332 = vmatpush2.bf16.msra.mxu0 0
    %333 = vmatprep.subr.bf16.mxu0 0
    %334 = vmatpush2.bf16.msra.mxu0 0
    %335 = vmatprep.subr.bf16.mxu0 0
    %336 = vmatpush2.bf16.msra.mxu0 0
    %337 = vmatprep.mubr.bf16.mxu0 0
    %338 = vmatmul.mubr.bf16.gmra.mxu0 %v296
    %v339 = vpop.f32.mrf.mxu0
    %v340 = vadd.f32 0.0, %v339
    %v341 = vpop.f32.mrf.mxu0
    %v342 = vpop.f32.mrf.mxu0
    %v343 = vadd.f32 0.0, %v342
    %v344 = vpop.f32.mrf.mxu0
    %345 = vdwg.mxu0
    %v346 = vpack.c.bf16 %v343, %v340
    %347 = vmatprep.subr.bf16.mxu0 0
    %348 = vmatpush1.bf16.msra.mxu0 0
    %349 = vmatprep.subr.bf16.mxu0 0
    %350 = vmatpush1.bf16.msra.mxu0 0
    %351 = vmatprep.subr.bf16.mxu0 0
    %352 = vmatpush1.bf16.msra.mxu0 0
    %353 = vmatprep.subr.bf16.mxu0 0
    %354 = vmatpush1.bf16.msra.mxu0 0
    %355 = vmatprep.subr.bf16.mxu0 0
    %356 = vmatpush1.bf16.msra.mxu0 0
    %357 = vmatprep.subr.bf16.mxu0 0
    %358 = vmatpush1.bf16.msra.mxu0 0
    %359 = vmatprep.subr.bf16.mxu0 0
    %360 = vmatpush1.bf16.msra.mxu0 0
    %361 = vmatprep.subr.bf16.mxu0 0
    %362 = vmatpush1.bf16.msra.mxu0 %v346
    %363 = vmatprep.subr.bf16.mxu0 0
    %364 = vmatpush2.bf16.msra.mxu0 0
    %365 = vmatprep.subr.bf16.mxu0 0
    %366 = vmatpush2.bf16.msra.mxu0 0
    %367 = vmatprep.subr.bf16.mxu0 0
    %368 = vmatpush2.bf16.msra.mxu0 0
    %369 = vmatprep.subr.bf16.mxu0 0
    %370 = vmatpush2.bf16.msra.mxu0 0
    %371 = vmatprep.subr.bf16.mxu0 0
    %372 = vmatpush2.bf16.msra.mxu0 0
    %373 = vmatprep.subr.bf16.mxu0 0
    %374 = vmatpush2.bf16.msra.mxu0 0
    %375 = vmatprep.subr.bf16.mxu0 0
    %376 = vmatpush2.bf16.msra.mxu0 0
    %377 = vmatprep.subr.bf16.mxu0 0
    %378 = vmatpush2.bf16.msra.mxu0 0
    %379 = vmatprep.mubr.bf16.mxu0 0
    %380 = vmatmul.mubr.bf16.gmra.mxu0 %v192
    %v381 = vpop.f32.mrf.mxu0
    %v382 = vadd.f32 0.0, %v381
    %v383 = vpop.f32.mrf.mxu0
    %v384 = vpop.f32.mrf.mxu0
    %v385 = vadd.f32 0.0, %v384
    %v386 = vpop.f32.mrf.mxu0
    %387 = vdwg.mxu0
    %v388 = vadd.f32 %v382, %v385
    %v389 = vrot.slane %v388, 4
    %v390 = vadd.f32 %v388, %v389
    %v391 = vrot.slane %v390, 2
    %v392 = vadd.f32 %v390, %v391
    %v393 = vrot.slane %v392, 1
    %v394 = vadd.f32 %v392, %v393
    %v395 = vmul.f32 %v394, %v242
    %v396 = vsub.f32 %v382, %v395
    %v397 = vsub.f32 %v385, %v395
    %v398 = vmul.f32 %v396, %v396
    %v399 = vmul.f32 %v397, %v397
    %v400 = vadd.f32 %v398, %v399
    %v401 = vrot.slane %v400, 4
    %v402 = vadd.f32 %v400, %v401
    %v403 = vrot.slane %v402, 2
    %v404 = vadd.f32 %v402, %v403
    %v405 = vrot.slane %v404, 1
    %v406 = vadd.f32 %v404, %v405
    %v407 = vmul.f32 %v406, %v242
    %s408 = scalar_lea.vmem %s5, 1
    %v409 = vld [vmem:[%s408] sm:$0x1]
    %v410 = vadd.f32 %v407, 1e-05
    %v411 = vrsqrt.pop %v410
    %v412 = vmul.f32 %v409, %v411
    %v414 = vlaneseq
    %v415 = vshrl.u32 %v414, 7
    %v416 = vsub.s32 0, %v415
    %v417 = vrot.slane %v412, %v416
    %v419 = vmul.f32 %v396, %v417
    %v420 = vmul.f32 %v397, %v417
    %s421 = scalar_lea.vmem %s6, 1
    %v422 = vld [vmem:[%s421] sm:$0x1]
    %v424 = vlaneseq
    %v425 = vshrl.u32 %v424, 7
    %v426 = vsub.s32 0, %v425
    %v427 = vrot.slane %v422, %v426
    %v429 = vadd.f32 %v419, %v427
    %v430 = vadd.f32 %v420, %v427
    %v431 = vld [vmem:[%s2] sm:$0x1]
    %v432 = vpack.c.bf16 %v430, %v429
    %v434 = vsel %vm190, %v431, 0
    %436 = vmatprep.subr.bf16.mxu0 0
    %437 = vmatpush1.bf16.msra.mxu0 0
    %438 = vmatprep.subr.bf16.mxu0 0
    %439 = vmatpush1.bf16.msra.mxu0 0
    %440 = vmatprep.subr.bf16.mxu0 0
    %441 = vmatpush1.bf16.msra.mxu0 0
    %442 = vmatprep.subr.bf16.mxu0 0
    %443 = vmatpush1.bf16.msra.mxu0 0
    %444 = vmatprep.subr.bf16.mxu0 0
    %445 = vmatpush1.bf16.msra.mxu0 0
    %446 = vmatprep.subr.bf16.mxu0 0
    %447 = vmatpush1.bf16.msra.mxu0 0
    %448 = vmatprep.subr.bf16.mxu0 0
    %449 = vmatpush1.bf16.msra.mxu0 0
    %450 = vmatprep.subr.bf16.mxu0 0
    %451 = vmatpush1.bf16.msra.mxu0 %v432
    %452 = vmatprep.subr.bf16.mxu0 0
    %453 = vmatpush2.bf16.msra.mxu0 0
    %454 = vmatprep.subr.bf16.mxu0 0
    %455 = vmatpush2.bf16.msra.mxu0 0
    %456 = vmatprep.subr.bf16.mxu0 0
    %457 = vmatpush2.bf16.msra.mxu0 0
    %458 = vmatprep.subr.bf16.mxu0 0
    %459 = vmatpush2.bf16.msra.mxu0 0
    %460 = vmatprep.subr.bf16.mxu0 0
    %461 = vmatpush2.bf16.msra.mxu0 0
    %462 = vmatprep.subr.bf16.mxu0 0
    %463 = vmatpush2.bf16.msra.mxu0 0
    %464 = vmatprep.subr.bf16.mxu0 0
    %465 = vmatpush2.bf16.msra.mxu0 0
    %466 = vmatprep.subr.bf16.mxu0 0
    %467 = vmatpush2.bf16.msra.mxu0 0
    %468 = vmatprep.mubr.bf16.mxu0 0
    %469 = vmatmul.mubr.bf16.gmra.mxu0 %v434
    %v470 = vpop.f32.mrf.mxu0
    %v471 = vadd.f32 0.0, %v470
    %v472 = vpop.f32.mrf.mxu0
    %v473 = vpop.f32.mrf.mxu0
    %v474 = vpop.f32.mrf.mxu0
    %475 = vdwg.mxu0
    %v476 = vld [vmem:[#allocation5] sm:$0xff]
    %v477 = vld [vmem:[#allocation5 + $0x8] sm:$0xff]
    %v478 = vld [vmem:[#allocation5 + $0x10] sm:$0xff]
    %v479 = vld [vmem:[#allocation5 + $0x18] sm:$0xff]
    %v480 = vld [vmem:[#allocation5 + $0x20] sm:$0xff]
    %v481 = vld [vmem:[#allocation5 + $0x28] sm:$0xff]
    %v482 = vld [vmem:[#allocation5 + $0x30] sm:$0xff]
    %v483 = vld [vmem:[#allocation5 + $0x38] sm:$0xff]
    %v484 = vld [vmem:[#allocation5 + $0x40] sm:$0xff]
    %v485 = vld [vmem:[#allocation5 + $0x48] sm:$0xff]
    %v486 = vld [vmem:[#allocation5 + $0x50] sm:$0xff]
    %v487 = vld [vmem:[#allocation5 + $0x58] sm:$0xff]
    %v488 = vld [vmem:[#allocation5 + $0x60] sm:$0xff]
    %v489 = vld [vmem:[#allocation5 + $0x68] sm:$0xff]
    %v490 = vld [vmem:[#allocation5 + $0x70] sm:$0xff]
    %v491 = vld [vmem:[#allocation5 + $0x78] sm:$0xff]
    %v492 = vpack.c.bf16 %v471, %v471
    %v493 = vpack.c.bf16 %v477, %v476
    %v494 = vpack.c.bf16 %v479, %v478
    %v495 = vpack.c.bf16 %v481, %v480
    %v496 = vpack.c.bf16 %v483, %v482
    %v497 = vpack.c.bf16 %v485, %v484
    %v498 = vpack.c.bf16 %v487, %v486
    %v499 = vpack.c.bf16 %v489, %v488
    %v500 = vpack.c.bf16 %v491, %v490
    %v501 = vld [vmem:[%s8] sm:$0x1]
    %v503 = vlaneseq
    %v504 = vshrl.u32 %v503, 7
    %v505 = vsub.s32 0, %v504
    %v506 = vrot.slane %v501, %v505
    %508 = vmatprep.subr.bf16.mxu0 0
    %509 = vmatpush1.bf16.msra.mxu0 %v500
    %510 = vmatprep.subr.bf16.mxu0 0
    %511 = vmatpush1.bf16.msra.mxu0 %v499
    %512 = vmatprep.subr.bf16.mxu0 0
    %513 = vmatpush1.bf16.msra.mxu0 %v498
    %514 = vmatprep.subr.bf16.mxu0 0
    %515 = vmatpush1.bf16.msra.mxu0 %v497
    %516 = vmatprep.subr.bf16.mxu0 0
    %517 = vmatpush1.bf16.msra.mxu0 %v496
    %518 = vmatprep.subr.bf16.mxu0 0
    %519 = vmatpush1.bf16.msra.mxu0 %v495
    %520 = vmatprep.subr.bf16.mxu0 0
    %521 = vmatpush1.bf16.msra.mxu0 %v494
    %522 = vmatprep.subr.bf16.mxu0 0
    %523 = vmatpush1.bf16.msra.mxu0 %v493
    %524 = vmatprep.subr.bf16.mxu0 0
    %525 = vmatpush2.bf16.msra.mxu0 0
    %526 = vmatprep.subr.bf16.mxu0 0
    %527 = vmatpush2.bf16.msra.mxu0 0
    %528 = vmatprep.subr.bf16.mxu0 0
    %529 = vmatpush2.bf16.msra.mxu0 0
    %530 = vmatprep.subr.bf16.mxu0 0
    %531 = vmatpush2.bf16.msra.mxu0 0
    %532 = vmatprep.subr.bf16.mxu0 0
    %533 = vmatpush2.bf16.msra.mxu0 0
    %534 = vmatprep.subr.bf16.mxu0 0
    %535 = vmatpush2.bf16.msra.mxu0 0
    %536 = vmatprep.subr.bf16.mxu0 0
    %537 = vmatpush2.bf16.msra.mxu0 0
    %538 = vmatprep.subr.bf16.mxu0 0
    %539 = vmatpush2.bf16.msra.mxu0 0
    %540 = vmatprep.mubr.bf16.mxu0 0
    %541 = vmatmul.mubr.bf16.gmra.mxu0 %v492
    %v542 = vpop.f32.mrf.mxu0
    %v543 = vadd.f32 %v506, %v542
    %v544 = vpop.f32.mrf.mxu0
    %v545 = vpop.f32.mrf.mxu0
    %v546 = vpop.f32.mrf.mxu0
    %547 = vdwg.mxu0
    %548 = vst [vmem:[#allocation7] sm:$0x3] %v543
    // Predicated region
    $region46: #{tpu_custom_call.1} parent=1 // pred_check
      _
    $region47: #{tpu_custom_call.1} parent=1 // pred_check_branch
      %550 = sbr.rel (0) target = $region49
    $region48: #{tpu_custom_call.1} parent=1 // pred_region
      %s552 = ssub.s32 32, 32
      %553 = vsyncadd [#allocation4], %s552
      %s555 = sshll.u32 [#allocation7], 4
      %s556 = int_to_ptr.vmem [resolvable:$true] %s555
      %558 = dma.vmem_to_hbm [thread:$0]  %s556, 32, %s9, [#allocation4]
    $region49: #{tpu_custom_call.1} parent=1 // pred_fallthru
      _
    // Predicated region
    $region50: #{tpu_custom_call.1} parent=1 // pred_check
      _
    $region51: #{tpu_custom_call.1} parent=1 // pred_check_branch
      %560 = sbr.rel (0) target = $region53
    $region52: #{tpu_custom_call.1} parent=1 // pred_region
      %561 = dma.done [#allocation4], 32
    $region53: #{tpu_custom_call.1} parent=1 // pred_fallthru
      _
    %562 = vsyncpa [#allocation3], 1
    %563 = vsyncpa [#allocation6], 1
    %564 = vsyncpa [#allocation4], 1

</llo_original>
